<compile_context>
chip_gen: v7x
topology: tpu7x:2x2x1
jax: 0.10.0
libtpu: 0.0.40
codegen_flags: <defaults>
</compile_context>

<pallas_src>
import functools

import jax
import jax.numpy as jnp
from jax import lax
from jax.experimental import pallas as pl
from jax.experimental.pallas import tpu as pltpu


# ---------------------------------------------------------------------------
# VMEM-capacity-aware budgets (128 MiB on v5e/v6e, 64 MiB per TC on v7x).
# ---------------------------------------------------------------------------
def _vmem_capacity_bytes() -> int:
    try:
        cap = getattr(pltpu.get_tpu_info(), "vmem_capacity_bytes", None)
        if cap:
            return int(cap)
    except Exception:
        pass
    return 64 << 20          # conservative default (v7x per-TensorCore VMEM)


_VMEM_CAP = _vmem_capacity_bytes()
# Scoped VMEM limit handed to Mosaic: ~96 MiB on 128 MiB parts, 48 MiB on v7x.
_VMEM_LIMIT = int(min((3 * _VMEM_CAP) // 4, 96 << 20))
# Budget for the big streamed operand block (Pallas double-buffers it).
_BLOCK_BUDGET = int(min(_VMEM_CAP // 8, 16 << 20))


def _round_up(x: int, m: int) -> int:
    return m * pl.cdiv(x, m)


# ---------------------------------------------------------------------------
# forward: head_emb + rel_emb (tiled elementwise add)
# ---------------------------------------------------------------------------
def _add_kernel(head_ref, rel_ref, out_ref):
    out_ref[...] = head_ref[...] + rel_ref[...]


def transe_forward(head_emb, rel_emb):
    B, D = head_emb.shape
    tb = B
    for cand in (1024, 512, 256, 128, 64, 32, 16, 8):
        if B % cand == 0 and cand * D * head_emb.dtype.itemsize <= _BLOCK_BUDGET:
            tb = cand
            break
    return pl.pallas_call(
        _add_kernel,
        out_shape=jax.ShapeDtypeStruct((B, D), head_emb.dtype),
        grid_spec=pltpu.PrefetchScalarGridSpec(
            num_scalar_prefetch=0,
            grid=(B // tb,),
            in_specs=[
                pl.BlockSpec((tb, D), lambda i: (i, 0)),
                pl.BlockSpec((tb, D), lambda i: (i, 0)),
            ],
            out_specs=pl.BlockSpec((tb, D), lambda i: (i, 0)),
        ),
        compiler_params=pltpu.CompilerParams(
            dimension_semantics=("parallel",)),
    )(head_emb, rel_emb)


# ---------------------------------------------------------------------------
# get_logits: gamma - ||pred[:, None, :] - ent_embed[None, :, :]||_1
# ---------------------------------------------------------------------------
def _l1_logits_kernel(pred_ref, ent_ref, out_ref, *, gamma):
    """One grid step: 8 pred rows x one entity tile.

    pred_ref : [1, D, 8]  -- 8 pred rows as columns, embedding dim on sublanes.
    ent_ref  : [D, tn]    -- transposed entity tile (entities lane-dense).
    out_ref  : [8, tn]

    With D on the sublane axis the reduction is (D/8 - 1) plain VPU adds per
    lane-column plus a cheap 8-sublane reduce; each result row is already
    lane-dense and is stored directly into its output row.
    """
    cols = pred_ref[0]                                         # [D, 8]
    for j in range(cols.shape[1]):                             # static unroll (8)
        col = cols[:, j:j + 1]                                 # [D, 1]
        dist = jnp.sum(jnp.abs(ent_ref[...] - col),
                       axis=0, dtype=jnp.float32)              # [tn], f32 accumulate
        out_ref[j, :] = (gamma - dist).astype(out_ref.dtype)


def transe_get_logits(pred, ent_embed, gamma):
    B, D = pred.shape
    E, _ = ent_embed.shape
    itemsize = ent_embed.dtype.itemsize

    # Batch padded to a multiple of 8; delivered as [B_pad//8, D, 8] column chunks
    # so the kernel never needs an in-kernel transpose or dynamic lane indexing.
    B_pad = _round_up(B, 8)
    pred_p = pred if B_pad == B else jnp.pad(pred, ((0, B_pad - B), (0, 0)))
    pred_cols = jnp.transpose(pred_p.reshape(B_pad // 8, 8, D), (0, 2, 1))

    # Entity tile: lane-dense, as large as the (generation-aware) budget allows.
    tn = min(_round_up(E, 128), 4096,
             max(128, (_BLOCK_BUDGET // (D * itemsize)) // 128 * 128))
    # TODO(synk): for very large D (> ~8192) add a D-chunk grid axis with an f32
    # VMEM accumulator (init/finalize via pl.when) instead of growing the block.
    E_pad = _round_up(E, tn)
    # In production store the table pre-transposed/padded; here the prep is one
    # cheap XLA pass outside the kernel.
    ent_t = ent_embed.T                                        # [D, E]
    if E_pad != E:
        ent_t = jnp.pad(ent_t, ((0, 0), (0, E_pad - E)))

    n_ent_tiles = E_pad // tn
    n_b_chunks = B_pad // 8
    bytes_acc = (itemsize * D * E_pad                      # entity table: read once
                 + itemsize * n_ent_tiles * B_pad * D      # pred chunks, re-read/tile
                 + pred.dtype.itemsize * B_pad * E_pad)    # logits written once

    out = pl.pallas_call(
        functools.partial(_l1_logits_kernel, gamma=float(gamma)),
        out_shape=jax.ShapeDtypeStruct((B_pad, E_pad), pred.dtype),
        grid_spec=pltpu.PrefetchScalarGridSpec(
            num_scalar_prefetch=0,
            # Entity axis OUTER, batch-chunk axis INNER: the entity block index is
            # constant over the inner sweep, so its DMA is elided -> ent_embed is
            # streamed from HBM exactly once per call.
            grid=(n_ent_tiles, n_b_chunks),
            in_specs=[
                pl.BlockSpec((1, D, 8), lambda j, i: (i, 0, 0)),
                pl.BlockSpec((D, tn), lambda j, i: (0, j)),
            ],
            out_specs=pl.BlockSpec((8, tn), lambda j, i: (i, j)),
        ),
        compiler_params=pltpu.CompilerParams(
            dimension_semantics=("parallel", "parallel"),
            vmem_limit_bytes=_VMEM_LIMIT,
        ),
        cost_estimate=pl.CostEstimate(
            flops=3 * B_pad * E_pad * D, transcendentals=0,
            bytes_accessed=bytes_acc),
    )(pred_cols, ent_t)
    return out[:B, :E]


# ---------------------------------------------------------------------------
# score_fn: gamma - ||pred[:, None, :] - sample_embed||_1
# ---------------------------------------------------------------------------
def _l1_score_kernel(pred_ref, samp_ref, out_ref, *, gamma):
    """pred_ref: [tb, D]; samp_ref: [tb, ts, D]; out_ref: [tb, ts]."""
    tb = pred_ref.shape[0]

    def chunk(c, carry):
        r0 = pl.multiple_of(c * 8, 8)
        prows = pred_ref[pl.ds(r0, 8), :]                           # [8, D]
        rows = []
        for j in range(8):                                          # static unroll
            diff = jnp.abs(samp_ref[r0 + j] - prows[j:j + 1, :])    # [ts, D] (VPU)
            # TODO(synk): if profiling shows this lane-axis reduce XLU-bound on
            # v6e/v7x, contract D via a ones-vector matmul on the idle MXU.
            rows.append(jnp.sum(diff, axis=-1, dtype=jnp.float32))  # [ts]
        out_ref[pl.ds(r0, 8), :] = (gamma - jnp.stack(rows)).astype(out_ref.dtype)
        return carry

    lax.fori_loop(0, tb // 8, chunk, 0)


def _score_tiles(B_pad, S, D, itemsize):
    """Pick (tb, ts, S_pad) so the sample block fits the (double-buffered) budget."""
    for tb in (128, 64, 32, 16, 8):
        if B_pad % tb == 0 and tb * S * D * itemsize <= _BLOCK_BUDGET:
            return tb, S, S
    # Fall back to tiling the sample axis (keeps v7x inside its 64 MiB VMEM).
    ts = 128
    for cand in (2048, 1024, 512, 256, 128):
        if 8 * cand * D * itemsize <= _BLOCK_BUDGET:
            ts = cand
            break
    return 8, ts, _round_up(S, ts)


def transe_score_fn(pred, sample_embed, bias, gamma):
    del bias  # frozen zero parameter; unused by the PyTorch score_fn body
    B, D = pred.shape
    _, S, _ = sample_embed.shape
    itemsize = sample_embed.dtype.itemsize

    B_pad = _round_up(B, 8)
    tb, ts, S_pad = _score_tiles(B_pad, S, D, itemsize)

    pred_p = pred if B_pad == B else jnp.pad(pred, ((0, B_pad - B), (0, 0)))
    samp_p = sample_embed
    if B_pad != B or S_pad != S:
        samp_p = jnp.pad(sample_embed,
                         ((0, B_pad - B), (0, S_pad - S), (0, 0)))

    out = pl.pallas_call(
        functools.partial(_l1_score_kernel, gamma=float(gamma)),
        out_shape=jax.ShapeDtypeStruct((B_pad, S_pad), pred.dtype),
        grid_spec=pltpu.PrefetchScalarGridSpec(
            num_scalar_prefetch=0,
            grid=(B_pad // tb, S_pad // ts),
            in_specs=[
                pl.BlockSpec((tb, D), lambda i, k: (i, 0)),
                pl.BlockSpec((tb, ts, D), lambda i, k: (i, k, 0)),
            ],
            out_specs=pl.BlockSpec((tb, ts), lambda i, k: (i, k)),
        ),
        compiler_params=pltpu.CompilerParams(
            dimension_semantics=("parallel", "parallel"),
            vmem_limit_bytes=_VMEM_LIMIT,
        ),
    )(pred_p, samp_p)
    return out[:B, :S]


# ---------------------------------------------------------------------------
# demo / correctness check
# ---------------------------------------------------------------------------
if __name__ == "__main__":
    key = jax.random.PRNGKey(0)
    k1, k2, k3, k4, k5, k6, k7 = jax.random.split(key, 7)

    B, D = 16, 128          # batch, embedding dim
    E = 384                 # configs.n_ent
    S = 128                 # negative samples per query
    gamma = 12.0            # configs.loss_gamma

    head_emb = jax.random.normal(k1, (B, D), dtype=jnp.float32)
    rel_emb = jax.random.normal(k2, (B, D), dtype=jnp.float32)
    ent_embed = jax.random.normal(k3, (E, D), dtype=jnp.float32)
    sample_embed = jax.random.normal(k4, (B, S, D), dtype=jnp.float32)
    bias = jnp.zeros((E,), dtype=jnp.float32)   # nn.Parameter, requires_grad=False

    # forward: head_emb + rel_emb
    pred = transe_forward(head_emb, rel_emb)
    jax.block_until_ready(pred)
    assert pred.shape == (B, D) and pred.dtype == head_emb.dtype
    assert bool(jnp.allclose(pred, head_emb + rel_emb, atol=1e-6))

    # get_logits: gamma - L1(pred, every entity)
    logits = transe_get_logits(pred, ent_embed, gamma)
    jax.block_until_ready(logits)
    ref_logits = gamma - jnp.sum(
        jnp.abs(pred[:, None, :] - ent_embed[None, :, :]), axis=-1)
    assert logits.shape == (B, E)
    assert bool(jnp.allclose(logits, ref_logits, atol=1e-3, rtol=1e-5))

    # score_fn: gamma - L1(pred, its negative samples)
    scores = transe_score_fn(pred, sample_embed, bias, gamma)
    jax.block_until_ready(scores)
    ref_scores = gamma - jnp.sum(jnp.abs(pred[:, None, :] - sample_embed), axis=-1)
    assert scores.shape == (B, S)
    assert bool(jnp.allclose(scores, ref_scores, atol=1e-3, rtol=1e-5))

    # Second (ragged) shape set exercising the batch / entity / sample padding paths.
    B2, E2, S2 = 12, 200, 96
    pred2 = jax.random.normal(k5, (B2, D), dtype=jnp.float32)
    ent2 = jax.random.normal(k6, (E2, D), dtype=jnp.float32)
    samp2 = jax.random.normal(k7, (B2, S2, D), dtype=jnp.float32)

    logits2 = transe_get_logits(pred2, ent2, gamma)
    jax.block_until_ready(logits2)
    ref_logits2 = gamma - jnp.sum(
        jnp.abs(pred2[:, None, :] - ent2[None, :, :]), axis=-1)
    assert logits2.shape == (B2, E2)
    assert bool(jnp.allclose(logits2, ref_logits2, atol=1e-3, rtol=1e-5))

    scores2 = transe_score_fn(pred2, samp2, bias, gamma)
    jax.block_until_ready(scores2)
    ref_scores2 = gamma - jnp.sum(jnp.abs(pred2[:, None, :] - samp2), axis=-1)
    assert scores2.shape == (B2, S2)
    assert bool(jnp.allclose(scores2, ref_scores2, atol=1e-3, rtol=1e-5))

    print("KERNEL_OK")
</pallas_src>

<mosaic_0001>
module attributes {stable_mosaic.version = 11 : i64} {
  func.func @_add_kernel(%arg0: i32, %arg1: memref<16x128xf32, #tpu.memory_space<vmem>>, %arg2: memref<16x128xf32, #tpu.memory_space<vmem>>, %arg3: memref<16x128xf32, #tpu.memory_space<vmem>>) attributes {dimension_semantics = [#tpu.dimension_semantics<parallel>], iteration_bounds = array<i64: 1>, scalar_prefetch = 0 : i64, scratch_operands = 0 : i64, tpu.core_type = #tpu.core_type<tc>, window_params = [{transform_indices = @transform_0, window_bounds = array<i64: 16, 128>}, {transform_indices = @transform_1, window_bounds = array<i64: 16, 128>}, {transform_indices = @transform_2, window_bounds = array<i64: 16, 128>}]} {
    %c0 = arith.constant 0 : index
    %c0_0 = arith.constant 0 : index
    %0 = vector.load %arg1[%c0, %c0_0] : memref<16x128xf32, #tpu.memory_space<vmem>>, vector<16x128xf32>
    %c0_1 = arith.constant 0 : index
    %c0_2 = arith.constant 0 : index
    %1 = vector.load %arg2[%c0_1, %c0_2] : memref<16x128xf32, #tpu.memory_space<vmem>>, vector<16x128xf32>
    %2 = arith.addf %0, %1 : vector<16x128xf32>
    %c0_3 = arith.constant 0 : index
    %c0_4 = arith.constant 0 : index
    %3 = vector.load %arg3[%c0_3, %c0_4] : memref<16x128xf32, #tpu.memory_space<vmem>>, vector<16x128xf32>
    tpu.vector_store %arg3[%c0_3, %c0_4], %2 {strides = array<i32>} : memref<16x128xf32, #tpu.memory_space<vmem>>, vector<16x128xf32>,
    return
  }
  func.func @transform_0(%arg0: i32) -> (i32, i32) {
    %c0_i32 = arith.constant 0 : i32
    %c0_i32_0 = arith.constant 0 : i32
    return %arg0, %c0_i32 : i32, i32
  }
  func.func @transform_1(%arg0: i32) -> (i32, i32) {
    %c0_i32 = arith.constant 0 : i32
    %c0_i32_0 = arith.constant 0 : i32
    return %arg0, %c0_i32 : i32, i32
  }
  func.func @transform_2(%arg0: i32) -> (i32, i32) {
    %c0_i32 = arith.constant 0 : i32
    %c0_i32_0 = arith.constant 0 : i32
    return %arg0, %c0_i32 : i32, i32
  }
}

</mosaic_0001>

<llo_original>
// kernel: tpu_custom_call.1
$region0: #{tpu_custom_call.1}
  #allocation0 [shape = 'u32[]', space=smem, size = 0x4, offset = 0x4, fixed_abs, tag = 'smem constant byte address 0x4 - core index']
  #allocation1 [shape = 'u32[144,128]{1,0:T(1,128)}', space=vmem, size = 0x12000, scoped, tag = 'internal scratch']
  %s0 = inlined_call_operand.hbm [shape: f32[16,128], index: 0, kind: input, shape index: {}]
  %s1 = inlined_call_operand.hbm [shape: f32[16,128], index: 1, kind: input, shape index: {}]
  %s2 = inlined_call_operand.hbm [shape: f32[16,128], index: 2, kind: output, shape index: {}]
  %s3 = sld [smem:[#allocation0]]
  $region26: #{tpu_custom_call.1} parent=0
    _
  %s5 = ssub.s32 1, %s3
  %s6 = scalar_select 0, %s5, %s3
  $region1: #{tpu_custom_call.1} parent=0
    #allocation2 [shape = 'u8[8192]{0}', space=vmem, size = 0x2000, scoped, tag = 'input window, operand 0, single buffered']
    #allocation3 [shape = 's32[1]{0}', space=sflag, size = 0x4, scoped, tag = 'scoped memory for tpu_custom_call.1']
    #allocation4 [shape = 's32[1]{0}', space=sflag, size = 0x4, scoped, tag = 'scoped memory for tpu_custom_call.1']
    #allocation5 [shape = 'u8[8192]{0}', space=vmem, size = 0x2000, scoped, tag = 'input window, operand 1, single buffered']
    #allocation6 [shape = 's32[1]{0}', space=sflag, size = 0x4, scoped, tag = 'scoped memory for tpu_custom_call.1']
    #allocation7 [shape = 'u8[8192]{0}', space=vmem, size = 0x2000, scoped, tag = 'output window, operand 0, single buffered']
    %7 = vsyncpa [#allocation3], 0
    %8 = vsyncpa [#allocation6], 0
    %9 = vsyncpa [#allocation4], 0
    // Predicated region
    $region2: #{tpu_custom_call.1} parent=1 // pred_check
      _
    $region3: #{tpu_custom_call.1} parent=1 // pred_check_branch
      %11 = sbr.rel (0) target = $region5
    $region4: #{tpu_custom_call.1} parent=1 // pred_region
      %s13 = ssub.s32 256, 256
      %14 = vsyncadd [#allocation3], %s13
      %s15 = sshll.u32 [#allocation2], 4
      %s16 = int_to_ptr.vmem [resolvable:$true] %s15
      %21 = dma.hbm_to_vmem [thread:$0]  %s0, 256, %s16, [#allocation3], 128, 128, 8
    $region5: #{tpu_custom_call.1} parent=1 // pred_fallthru
      _
    // Predicated region
    $region6: #{tpu_custom_call.1} parent=1 // pred_check
      _
    $region7: #{tpu_custom_call.1} parent=1 // pred_check_branch
      %23 = sbr.rel (0) target = $region9
    $region8: #{tpu_custom_call.1} parent=1 // pred_region
      %s25 = ssub.s32 256, 256
      %26 = vsyncadd [#allocation6], %s25
      %s27 = sshll.u32 [#allocation5], 4
      %s28 = int_to_ptr.vmem [resolvable:$true] %s27
      %33 = dma.hbm_to_vmem [thread:$0]  %s1, 256, %s28, [#allocation6], 128, 128, 8
    $region9: #{tpu_custom_call.1} parent=1 // pred_fallthru
      _
    // Predicated region
    $region10: #{tpu_custom_call.1} parent=1 // pred_check
      _
    $region11: #{tpu_custom_call.1} parent=1 // pred_check_branch
      %35 = sbr.rel (0) target = $region13
    $region12: #{tpu_custom_call.1} parent=1 // pred_region
      %36 = dma.done [#allocation3], 256
    $region13: #{tpu_custom_call.1} parent=1 // pred_fallthru
      _
    // Predicated region
    $region14: #{tpu_custom_call.1} parent=1 // pred_check
      _
    $region15: #{tpu_custom_call.1} parent=1 // pred_check_branch
      %38 = sbr.rel (0) target = $region17
    $region16: #{tpu_custom_call.1} parent=1 // pred_region
      %39 = dma.done [#allocation6], 256
    $region17: #{tpu_custom_call.1} parent=1 // pred_fallthru
      _
    %v40 = vld [vmem:[#allocation2] sm:$0xff]
    %v41 = vld [vmem:[#allocation2 + $0x8] sm:$0xff]
    %v42 = vld [vmem:[#allocation5] sm:$0xff]
    %v43 = vld [vmem:[#allocation5 + $0x8] sm:$0xff]
    %v44 = vadd.f32 %v40, %v42
    %v45 = vadd.f32 %v41, %v43
    %46 = vst [vmem:[#allocation7] sm:$0xff] %v44
    %47 = vst [vmem:[#allocation7 + $0x8] sm:$0xff] %v45
    // Predicated region
    $region18: #{tpu_custom_call.1} parent=1 // pred_check
      _
    $region19: #{tpu_custom_call.1} parent=1 // pred_check_branch
      %49 = sbr.rel (0) target = $region21
    $region20: #{tpu_custom_call.1} parent=1 // pred_region
      %s51 = ssub.s32 256, 256
      %52 = vsyncadd [#allocation4], %s51
      %s53 = sshll.u32 [#allocation7], 4
      %s54 = int_to_ptr.vmem [resolvable:$true] %s53
      %59 = dma.vmem_to_hbm [thread:$0]  %s54, 256, %s2, [#allocation4], 128, 128, 8
    $region21: #{tpu_custom_call.1} parent=1 // pred_fallthru
      _
    // Predicated region
    $region22: #{tpu_custom_call.1} parent=1 // pred_check
      _
    $region23: #{tpu_custom_call.1} parent=1 // pred_check_branch
      %61 = sbr.rel (0) target = $region25
    $region24: #{tpu_custom_call.1} parent=1 // pred_region
      %62 = dma.done [#allocation4], 256
    $region25: #{tpu_custom_call.1} parent=1 // pred_fallthru
      _
    %63 = vsyncpa [#allocation3], 1
    %64 = vsyncpa [#allocation6], 1
    %65 = vsyncpa [#allocation4], 1

</llo_original>
